<compile_context>
chip_gen: v7x
topology: tpu7x:2x2x1
jax: 0.10.0
libtpu: 0.0.40
codegen_flags: <defaults>
</compile_context>

<pallas_src>
import functools

import jax
import jax.numpy as jnp
from jax.experimental import pallas as pl
from jax.experimental.pallas import tpu as pltpu


def _weights(num_cols, step):
    # gaussian_weights[j] = j * step == linspace(0, r_max, num_basis)[j]
    return jax.lax.broadcasted_iota(
        jnp.int32, (1, num_cols), 1).astype(jnp.float32) * step


def _gb_kernel_lane(x_ref, o_ref, *, coeff, step):
    """x_ref: (1, block_n) lane-dense distances; o_ref: (block_n, nb_pad)."""
    block_n, nb = o_ref.shape
    x_row = x_ref[...].astype(jnp.float32)                       # (1, block_n)
    # Lane -> sublane relayout: replicate to a tile-aligned (8, block_n) slab,
    # transpose on the XLU (otherwise idle here), keep lane 0.
    x_col = jnp.transpose(jnp.broadcast_to(x_row, (8, block_n)), (1, 0))[:, 0:1]
    d = x_col - _weights(nb, step)                               # (block_n, nb)
    o_ref[...] = jnp.exp(coeff * (d * d)).astype(o_ref.dtype)


def _gb_kernel_col(x_ref, o_ref, *, coeff, step):
    """x_ref: (block_n, 1) column of distances; o_ref: (block_n, nb_pad)."""
    nb = o_ref.shape[1]
    x = x_ref[...].astype(jnp.float32)                           # (block_n, 1)
    d = x - _weights(nb, step)
    o_ref[...] = jnp.exp(coeff * (d * d)).astype(o_ref.dtype)


def _build_call(n, nb_pad, block_n, x_dtype, out_dtype, coeff, step, lane_dense):
    grid = (pl.cdiv(n, block_n),)
    cost = pl.CostEstimate(
        flops=int(3 * n * nb_pad),
        transcendentals=int(n * nb_pad),
        bytes_accessed=int(n * jnp.dtype(x_dtype).itemsize
                           + n * nb_pad * jnp.dtype(out_dtype).itemsize),
    )
    if lane_dense:
        kernel = functools.partial(_gb_kernel_lane, coeff=coeff, step=step)
        in_specs = [pl.BlockSpec((1, block_n), lambda i: (0, i))]
    else:
        kernel = functools.partial(_gb_kernel_col, coeff=coeff, step=step)
        in_specs = [pl.BlockSpec((block_n, 1), lambda i: (i, 0))]
    return pl.pallas_call(
        kernel,
        out_shape=jax.ShapeDtypeStruct((n, nb_pad), out_dtype),
        grid_spec=pltpu.PrefetchScalarGridSpec(
            num_scalar_prefetch=0,
            grid=grid,
            in_specs=in_specs,
            out_specs=pl.BlockSpec((block_n, nb_pad), lambda i: (i, 0)),
        ),
        compiler_params=pltpu.CompilerParams(
            dimension_semantics=("parallel",),
        ),
        cost_estimate=cost,
    )


_LANE_DENSE_SUPPORTED = None


def _lane_dense_supported():
    """One-time probe: does the lane->sublane relayout lower & compute correctly?"""
    global _LANE_DENSE_SUPPORTED
    if _LANE_DENSE_SUPPORTED is None:
        try:
            n, nb, r_max = 256, 128, 5.0
            step = r_max / (nb - 1)
            coeff = -0.5 / step ** 2
            x = jnp.linspace(0.0, r_max, n, dtype=jnp.float32)
            got = _build_call(n, nb, 256, jnp.float32, jnp.float32,
                              coeff, step, True)(x.reshape(1, n))
            got = jax.block_until_ready(got)
            want = jnp.exp(
                coeff * (x[:, None] - jnp.arange(nb, dtype=jnp.float32) * step) ** 2)
            _LANE_DENSE_SUPPORTED = bool(
                jnp.allclose(got, want, atol=1e-5, rtol=1e-5))
        except Exception:  # relayout not supported -> known-good column layout
            _LANE_DENSE_SUPPORTED = False
    return _LANE_DENSE_SUPPORTED


def gaussian_basis(x, r_max=5.0, num_basis=128, block_n=None, out_dtype=None):
    """GaussianBasis forward: x (N, 1) distances -> (N, num_basis) basis values.

    out_dtype defaults to x.dtype (module semantics).  Pass jnp.bfloat16 (or a
    v7x fp8 dtype) when the consumer tolerates it to shrink the dominant HBM
    write stream.  block_n=None auto-sizes ~1 MiB output tiles; explicit
    block_n is rounded to the layout's alignment.
    """
    assert x.ndim == 2 and x.shape[1] == 1, "expected (N, 1) distances"
    assert num_basis >= 2, "num_basis must be >= 2 (matches the PyTorch module)"
    n = x.shape[0]
    out_dtype = jnp.dtype(x.dtype if out_dtype is None else out_dtype)

    # Keep the output lane-dense: pad the basis dim to a multiple of 128 so
    # stores are unmasked full-lane vst; extra columns are sliced off below.
    nb_pad = -(-num_basis // 128) * 128

    lane_dense = _lane_dense_supported()
    align = 128 if lane_dense else 8
    n_r = -(-n // align) * align

    if block_n is None:
        # ~1 MiB of real HBM bytes per output tile (~85% of HBM roofline),
        # independent of out_dtype (f32 -> 2048 rows, bf16 -> 4096, fp8 -> 8192).
        block_n = (1 << 20) // (nb_pad * out_dtype.itemsize)
        block_n = max(1024, min(block_n, 8192))
    if not lane_dense:
        # Column-layout x lane-pads to (block_n, 128) f32 in VMEM; keep the
        # double-buffered working set under v5e's 16 MiB scoped default.
        block_n = min(block_n, 4096)
    # v7x: 2 TensorCores share HBM; for mid-sized N that would otherwise be a
    # single grid step, split into two balanced tiles.
    if 2048 <= n_r <= block_n:
        block_n = n_r // 2
    block_n = max(align, min(block_n, n_r))
    block_n = -(-block_n // align) * align

    step = float(r_max) / (num_basis - 1)
    coeff = -0.5 / step ** 2

    call = _build_call(n, nb_pad, block_n, x.dtype, out_dtype, coeff, step,
                       lane_dense)
    out = call(x.reshape(1, n) if lane_dense else x)

    if nb_pad != num_basis:
        out = out[:, :num_basis]
    return out


def gaussian_basis_ref(x, r_max=5.0, num_basis=128):
    """Pure-JAX reference mirroring the PyTorch forward."""
    gaussian_weights = jnp.linspace(0.0, r_max, num_basis, dtype=jnp.float32)
    coeff = -0.5 / (r_max / (num_basis - 1)) ** 2
    d = x.astype(jnp.float32) - gaussian_weights
    return jnp.exp(coeff * d * d).astype(x.dtype)


if __name__ == "__main__":
    key = jax.random.PRNGKey(0)
    r_max = 5.0
    num_basis = 128
    n_edges = 300  # deliberately NOT a multiple of any tile -> partial block

    x = jax.random.uniform(key, (n_edges, 1), dtype=jnp.float32) * r_max
    ref = gaussian_basis_ref(x, r_max=r_max, num_basis=num_basis)

    # Default auto tile (single grid step for this small N).
    out = jax.block_until_ready(
        gaussian_basis(x, r_max=r_max, num_basis=num_basis))
    assert out.shape == (n_edges, num_basis)
    assert jnp.allclose(out, ref, atol=2e-5, rtol=1e-5)

    # Multi-step grid with a masked partial last block (300 = 2*128 + 44).
    out2 = jax.block_until_ready(
        gaussian_basis(x, r_max=r_max, num_basis=num_basis, block_n=128))
    assert jnp.allclose(out2, ref, atol=2e-5, rtol=1e-5)

    # bf16 output (halves the dominant HBM write stream); larger N exercises
    # the balanced two-step grid and the multi-block input path.
    n_big = 2500
    xb = jax.random.uniform(jax.random.PRNGKey(1), (n_big, 1),
                            dtype=jnp.float32) * r_max
    refb = gaussian_basis_ref(xb, r_max=r_max, num_basis=num_basis)
    outb = jax.block_until_ready(
        gaussian_basis(xb, r_max=r_max, num_basis=num_basis,
                       out_dtype=jnp.bfloat16))
    assert outb.dtype == jnp.bfloat16
    assert jnp.allclose(outb.astype(jnp.float32), refb, atol=1e-2, rtol=2e-2)

    # num_basis not a multiple of 128: padded in-kernel, sliced in the wrapper.
    ref20 = gaussian_basis_ref(x, r_max=r_max, num_basis=20)
    out20 = jax.block_until_ready(gaussian_basis(x, r_max=r_max, num_basis=20))
    assert out20.shape == (n_edges, 20)
    assert jnp.allclose(out20, ref20, atol=2e-5, rtol=1e-5)

    print("KERNEL_OK")
</pallas_src>

<mosaic_0001>
module attributes {stable_mosaic.version = 11 : i64} {
  func.func @_gb_kernel_lane(%arg0: i32, %arg1: memref<1x256xf32, #tpu.memory_space<vmem>>, %arg2: memref<256x128xf32, #tpu.memory_space<vmem>>) attributes {dimension_semantics = [#tpu.dimension_semantics<parallel>], iteration_bounds = array<i64: 1>, scalar_prefetch = 0 : i64, scratch_operands = 0 : i64, tpu.core_type = #tpu.core_type<tc>, window_params = [{transform_indices = @transform_0, window_bounds = array<i64: 1, 256>}, {transform_indices = @transform_1, window_bounds = array<i64: 256, 128>}]} {
    %c0 = arith.constant 0 : index
    %c0_0 = arith.constant 0 : index
    %0 = vector.load %arg1[%c0, %c0_0] : memref<1x256xf32, #tpu.memory_space<vmem>>, vector<1x256xf32>
    %1 = vector.shape_cast %0 : vector<1x256xf32> to vector<1x256xf32>
    %2 = vector.broadcast %1 : vector<1x256xf32> to vector<8x256xf32>
    %3 = tpu.transpose %2, [1, 0] : vector<8x256xf32> -> vector<256x8xf32>
    %4 = vector.extract_strided_slice %3 {offsets = [0, 0], sizes = [256, 1], strides = [1, 1]} : vector<256x8xf32> to vector<256x1xf32>
    %5 = tpu.iota {dimensions = array<i32: 1>} : vector<1x128xi32>
    %6 = arith.sitofp %5 : vector<1x128xi32> to vector<1x128xf32>
    %cst = arith.constant 0.0393700786 : f32
    %7 = vector.broadcast %cst : f32 to vector<1x128xf32>
    %8 = arith.mulf %6, %7 : vector<1x128xf32>
    %9 = vector.broadcast %4 : vector<256x1xf32> to vector<256x128xf32>
    %10 = vector.broadcast %8 : vector<1x128xf32> to vector<256x128xf32>
    %11 = arith.subf %9, %10 : vector<256x128xf32>
    %12 = arith.mulf %11, %11 : vector<256x128xf32>
    %cst_1 = arith.constant -3.225800e+02 : f32
    %13 = vector.broadcast %cst_1 : f32 to vector<256x128xf32>
    %14 = arith.mulf %13, %12 : vector<256x128xf32>
    %15 = math.exp %14 : vector<256x128xf32>
    %c0_2 = arith.constant 0 : index
    %c0_3 = arith.constant 0 : index
    %16 = vector.load %arg2[%c0_2, %c0_3] : memref<256x128xf32, #tpu.memory_space<vmem>>, vector<256x128xf32>
    tpu.vector_store %arg2[%c0_2, %c0_3], %15 {strides = array<i32>} : memref<256x128xf32, #tpu.memory_space<vmem>>, vector<256x128xf32>,
    return
  }
  func.func @transform_0(%arg0: i32) -> (i32, i32) {
    %c0_i32 = arith.constant 0 : i32
    %c0_i32_0 = arith.constant 0 : i32
    return %c0_i32, %arg0 : i32, i32
  }
  func.func @transform_1(%arg0: i32) -> (i32, i32) {
    %c0_i32 = arith.constant 0 : i32
    %c0_i32_0 = arith.constant 0 : i32
    return %arg0, %c0_i32 : i32, i32
  }
}

module attributes {stable_mosaic.version = 11 : i64} {
  func.func @_gb_kernel_col(%arg0: i32, %arg1: memref<304x1xf32, #tpu.memory_space<vmem>>, %arg2: memref<304x128xf32, #tpu.memory_space<vmem>>) attributes {dimension_semantics = [#tpu.dimension_semantics<parallel>], iteration_bounds = array<i64: 1>, scalar_prefetch = 0 : i64, scratch_operands = 0 : i64, tpu.core_type = #tpu.core_type<tc>, window_params = [{transform_indices = @transform_0, window_bounds = array<i64: 304, 1>}, {transform_indices = @transform_1, window_bounds = array<i64: 304, 128>}]} {
    %c0 = arith.constant 0 : index
    %c0_0 = arith.constant 0 : index
    %0 = vector.load %arg1[%c0, %c0_0] : memref<304x1xf32, #tpu.memory_space<vmem>>, vector<304x1xf32>
    %1 = tpu.iota {dimensions = array<i32: 1>} : vector<1x128xi32>
    %2 = arith.sitofp %1 : vector<1x128xi32> to vector<1x128xf32>
    %cst = arith.constant 0.0393700786 : f32
    %3 = vector.broadcast %cst : f32 to vector<1x128xf32>
    %4 = arith.mulf %2, %3 : vector<1x128xf32>
    %5 = vector.broadcast %0 : vector<304x1xf32> to vector<304x128xf32>
    %6 = vector.broadcast %4 : vector<1x128xf32> to vector<304x128xf32>
    %7 = arith.subf %5, %6 : vector<304x128xf32>
    %8 = arith.mulf %7, %7 : vector<304x128xf32>
    %cst_1 = arith.constant -3.225800e+02 : f32
    %9 = vector.broadcast %cst_1 : f32 to vector<304x128xf32>
    %10 = arith.mulf %9, %8 : vector<304x128xf32>
    %11 = math.exp %10 : vector<304x128xf32>
    %c0_2 = arith.constant 0 : index
    %c0_3 = arith.constant 0 : index
    %12 = vector.load %arg2[%c0_2, %c0_3] : memref<304x128xf32, #tpu.memory_space<vmem>>, vector<304x128xf32>
    tpu.vector_store %arg2[%c0_2, %c0_3], %11 {strides = array<i32>} : memref<304x128xf32, #tpu.memory_space<vmem>>, vector<304x128xf32>,
    return
  }
  func.func @transform_0(%arg0: i32) -> (i32, i32) {
    %c0_i32 = arith.constant 0 : i32
    %c0_i32_0 = arith.constant 0 : i32
    return %arg0, %c0_i32 : i32, i32
  }
  func.func @transform_1(%arg0: i32) -> (i32, i32) {
    %c0_i32 = arith.constant 0 : i32
    %c0_i32_0 = arith.constant 0 : i32
    return %arg0, %c0_i32 : i32, i32
  }
}

</mosaic_0001>

<llo_original>
// kernel: tpu_custom_call.1
$region0: #{tpu_custom_call.1}
  #allocation0 [shape = 'u32[]', space=smem, size = 0x4, offset = 0x4, fixed_abs, tag = 'smem constant byte address 0x4 - core index']
  #allocation1 [shape = 'u32[144,128]{1,0:T(1,128)}', space=vmem, size = 0x12000, scoped, tag = 'internal scratch']
  %s0 = inlined_call_operand.hbm [shape: f32[1,256], index: 0, kind: input, shape index: {}]
  %s1 = inlined_call_operand.hbm [shape: f32[256,128], index: 1, kind: output, shape index: {}]
  %s2 = sld [smem:[#allocation0]]
  $region18: #{tpu_custom_call.1} parent=0
    _
  %s4 = ssub.s32 1, %s2
  %s5 = scalar_select 0, %s4, %s2
  $region1: #{tpu_custom_call.1} parent=0
    #allocation2 [shape = 'u8[1024]{0}', space=vmem, size = 0x400, scoped, tag = 'input window, operand 0, single buffered']
    #allocation3 [shape = 's32[1]{0}', space=sflag, size = 0x4, scoped, tag = 'scoped memory for tpu_custom_call.1']
    #allocation4 [shape = 's32[1]{0}', space=sflag, size = 0x4, scoped, tag = 'scoped memory for tpu_custom_call.1']
    #allocation5 [shape = 'u8[131072]{0}', space=vmem, size = 0x20000, scoped, tag = 'output window, operand 0, single buffered']
    %6 = vsyncpa [#allocation3], 0
    %7 = vsyncpa [#allocation4], 0
    // Predicated region
    $region2: #{tpu_custom_call.1} parent=1 // pred_check
      _
    $region3: #{tpu_custom_call.1} parent=1 // pred_check_branch
      %9 = sbr.rel (0) target = $region5
    $region4: #{tpu_custom_call.1} parent=1 // pred_region
      %s11 = ssub.s32 32, 32
      %12 = vsyncadd [#allocation3], %s11
      %s14 = sshll.u32 [#allocation2], 4
      %s15 = int_to_ptr.vmem [resolvable:$true] %s14
      %17 = dma.hbm_to_vmem [thread:$0]  %s0, 32, %s15, [#allocation3]
    $region5: #{tpu_custom_call.1} parent=1 // pred_fallthru
      _
    // Predicated region
    $region6: #{tpu_custom_call.1} parent=1 // pred_check
      _
    $region7: #{tpu_custom_call.1} parent=1 // pred_check_branch
      %19 = sbr.rel (0) target = $region9
    $region8: #{tpu_custom_call.1} parent=1 // pred_region
      %20 = dma.done [#allocation3], 32
    $region9: #{tpu_custom_call.1} parent=1 // pred_fallthru
      _
    %v21 = vld [vmem:[#allocation2] sm:$0x3]
    %v23 = vlaneseq
    %v24 = vshrl.u32 %v23, 7
    %v25 = vsub.s32 0, %v24
    %v26 = vrot.slane %v21, %v25
    %v27 = vlaneseq
    %v28 = vshrl.u32 %v27, 7
    %v29 = vsub.s32 1, %v28
    %v30 = vrot.slane %v21, %v29
    %33 = vxpose.xlu0.b32.start [1/16] %v26, 128
    %34 = vxpose.xlu0.b32.cont [2/16] 0.0, 128
    %35 = vxpose.xlu0.b32.cont [3/16] 0.0, 128
    %36 = vxpose.xlu0.b32.cont [4/16] 0.0, 128
    %37 = vxpose.xlu0.b32.cont [5/16] 0.0, 128
    %38 = vxpose.xlu0.b32.cont [6/16] 0.0, 128
    %39 = vxpose.xlu0.b32.cont [7/16] 0.0, 128
    %40 = vxpose.xlu0.b32.cont [8/16] 0.0, 128
    %41 = vxpose.xlu0.b32.cont [9/16] 0.0, 128
    %42 = vxpose.xlu0.b32.cont [10/16] 0.0, 128
    %43 = vxpose.xlu0.b32.cont [11/16] 0.0, 128
    %44 = vxpose.xlu0.b32.cont [12/16] 0.0, 128
    %45 = vxpose.xlu0.b32.cont [13/16] 0.0, 128
    %46 = vxpose.xlu0.b32.cont [14/16] 0.0, 128
    %47 = vxpose.xlu0.b32.cont [15/16] 0.0, 128
    %48 = vxpose.xlu0.b32.end [16/16] 0.0, 128
    %v49 = vpop.trf.xlu0
    %v50 = vpop.trf.xlu0
    %v51 = vpop.trf.xlu0
    %v52 = vpop.trf.xlu0
    %v53 = vpop.trf.xlu0
    %v54 = vpop.trf.xlu0
    %v55 = vpop.trf.xlu0
    %v56 = vpop.trf.xlu0
    %v57 = vpop.trf.xlu0
    %v58 = vpop.trf.xlu0
    %v59 = vpop.trf.xlu0
    %v60 = vpop.trf.xlu0
    %v61 = vpop.trf.xlu0
    %v62 = vpop.trf.xlu0
    %v63 = vpop.trf.xlu0
    %v64 = vpop.trf.xlu0
    %65 = vxpose.xlu0.b32.start [1/16] %v30, 128
    %66 = vxpose.xlu0.b32.cont [2/16] 0.0, 128
    %67 = vxpose.xlu0.b32.cont [3/16] 0.0, 128
    %68 = vxpose.xlu0.b32.cont [4/16] 0.0, 128
    %69 = vxpose.xlu0.b32.cont [5/16] 0.0, 128
    %70 = vxpose.xlu0.b32.cont [6/16] 0.0, 128
    %71 = vxpose.xlu0.b32.cont [7/16] 0.0, 128
    %72 = vxpose.xlu0.b32.cont [8/16] 0.0, 128
    %73 = vxpose.xlu0.b32.cont [9/16] 0.0, 128
    %74 = vxpose.xlu0.b32.cont [10/16] 0.0, 128
    %75 = vxpose.xlu0.b32.cont [11/16] 0.0, 128
    %76 = vxpose.xlu0.b32.cont [12/16] 0.0, 128
    %77 = vxpose.xlu0.b32.cont [13/16] 0.0, 128
    %78 = vxpose.xlu0.b32.cont [14/16] 0.0, 128
    %79 = vxpose.xlu0.b32.cont [15/16] 0.0, 128
    %80 = vxpose.xlu0.b32.end [16/16] 0.0, 128
    %v81 = vpop.trf.xlu0
    %v82 = vpop.trf.xlu0
    %v83 = vpop.trf.xlu0
    %v84 = vpop.trf.xlu0
    %v85 = vpop.trf.xlu0
    %v86 = vpop.trf.xlu0
    %v87 = vpop.trf.xlu0
    %v88 = vpop.trf.xlu0
    %v89 = vpop.trf.xlu0
    %v90 = vpop.trf.xlu0
    %v91 = vpop.trf.xlu0
    %v92 = vpop.trf.xlu0
    %v93 = vpop.trf.xlu0
    %v94 = vpop.trf.xlu0
    %v95 = vpop.trf.xlu0
    %v96 = vpop.trf.xlu0
    %v97 = vlaneseq
    %v98 = vand.u32 %v97, 127
    %v99 = vcvt.s32.f32 %v98
    %v100 = vmul.f32 %v99, 0.03937008
    %102 = vset.pattern.permute.xlu0 0
    %103 = vperm.xlu0 %102, %v49
    %v104 = vpop.permute.xlu0 %103
    %107 = vset.pattern.permute.xlu0 0
    %108 = vperm.xlu0 %107, %v50
    %v109 = vpop.permute.xlu0 %108
    %112 = vset.pattern.permute.xlu0 0
    %113 = vperm.xlu0 %112, %v51
    %v114 = vpop.permute.xlu0 %113
    %117 = vset.pattern.permute.xlu0 0
    %118 = vperm.xlu0 %117, %v52
    %v119 = vpop.permute.xlu0 %118
    %122 = vset.pattern.permute.xlu0 0
    %123 = vperm.xlu0 %122, %v53
    %v124 = vpop.permute.xlu0 %123
    %127 = vset.pattern.permute.xlu0 0
    %128 = vperm.xlu0 %127, %v54
    %v129 = vpop.permute.xlu0 %128
    %132 = vset.pattern.permute.xlu0 0
    %133 = vperm.xlu0 %132, %v55
    %v134 = vpop.permute.xlu0 %133
    %137 = vset.pattern.permute.xlu0 0
    %138 = vperm.xlu0 %137, %v56
    %v139 = vpop.permute.xlu0 %138
    %142 = vset.pattern.permute.xlu0 0
    %143 = vperm.xlu0 %142, %v57
    %v144 = vpop.permute.xlu0 %143
    %147 = vset.pattern.permute.xlu0 0
    %148 = vperm.xlu0 %147, %v58
    %v149 = vpop.permute.xlu0 %148
    %152 = vset.pattern.permute.xlu0 0
    %153 = vperm.xlu0 %152, %v59
    %v154 = vpop.permute.xlu0 %153
    %157 = vset.pattern.permute.xlu0 0
    %158 = vperm.xlu0 %157, %v60
    %v159 = vpop.permute.xlu0 %158
    %162 = vset.pattern.permute.xlu0 0
    %163 = vperm.xlu0 %162, %v61
    %v164 = vpop.permute.xlu0 %163
    %167 = vset.pattern.permute.xlu0 0
    %168 = vperm.xlu0 %167, %v62
    %v169 = vpop.permute.xlu0 %168
    %172 = vset.pattern.permute.xlu0 0
    %173 = vperm.xlu0 %172, %v63
    %v174 = vpop.permute.xlu0 %173
    %177 = vset.pattern.permute.xlu0 0
    %178 = vperm.xlu0 %177, %v64
    %v179 = vpop.permute.xlu0 %178
    %182 = vset.pattern.permute.xlu0 0
    %183 = vperm.xlu0 %182, %v81
    %v184 = vpop.permute.xlu0 %183
    %187 = vset.pattern.permute.xlu0 0
    %188 = vperm.xlu0 %187, %v82
    %v189 = vpop.permute.xlu0 %188
    %192 = vset.pattern.permute.xlu0 0
    %193 = vperm.xlu0 %192, %v83
    %v194 = vpop.permute.xlu0 %193
    %197 = vset.pattern.permute.xlu0 0
    %198 = vperm.xlu0 %197, %v84
    %v199 = vpop.permute.xlu0 %198
    %202 = vset.pattern.permute.xlu0 0
    %203 = vperm.xlu0 %202, %v85
    %v204 = vpop.permute.xlu0 %203
    %207 = vset.pattern.permute.xlu0 0
    %208 = vperm.xlu0 %207, %v86
    %v209 = vpop.permute.xlu0 %208
    %212 = vset.pattern.permute.xlu0 0
    %213 = vperm.xlu0 %212, %v87
    %v214 = vpop.permute.xlu0 %213
    %217 = vset.pattern.permute.xlu0 0
    %218 = vperm.xlu0 %217, %v88
    %v219 = vpop.permute.xlu0 %218
    %222 = vset.pattern.permute.xlu0 0
    %223 = vperm.xlu0 %222, %v89
    %v224 = vpop.permute.xlu0 %223
    %227 = vset.pattern.permute.xlu0 0
    %228 = vperm.xlu0 %227, %v90
    %v229 = vpop.permute.xlu0 %228
    %232 = vset.pattern.permute.xlu0 0
    %233 = vperm.xlu0 %232, %v91
    %v234 = vpop.permute.xlu0 %233
    %237 = vset.pattern.permute.xlu0 0
    %238 = vperm.xlu0 %237, %v92
    %v239 = vpop.permute.xlu0 %238
    %242 = vset.pattern.permute.xlu0 0
    %243 = vperm.xlu0 %242, %v93
    %v244 = vpop.permute.xlu0 %243
    %247 = vset.pattern.permute.xlu0 0
    %248 = vperm.xlu0 %247, %v94
    %v249 = vpop.permute.xlu0 %248
    %252 = vset.pattern.permute.xlu0 0
    %253 = vperm.xlu0 %252, %v95
    %v254 = vpop.permute.xlu0 %253
    %257 = vset.pattern.permute.xlu0 0
    %258 = vperm.xlu0 %257, %v96
    %v259 = vpop.permute.xlu0 %258
    %v261 = vsub.f32 %v104, %v100
    %v262 = vsub.f32 %v109, %v100
    %v263 = vsub.f32 %v114, %v100
    %v264 = vsub.f32 %v119, %v100
    %v265 = vsub.f32 %v124, %v100
    %v266 = vsub.f32 %v129, %v100
    %v267 = vsub.f32 %v134, %v100
    %v268 = vsub.f32 %v139, %v100
    %v269 = vsub.f32 %v144, %v100
    %v270 = vsub.f32 %v149, %v100
    %v271 = vsub.f32 %v154, %v100
    %v272 = vsub.f32 %v159, %v100
    %v273 = vsub.f32 %v164, %v100
    %v274 = vsub.f32 %v169, %v100
    %v275 = vsub.f32 %v174, %v100
    %v276 = vsub.f32 %v179, %v100
    %v277 = vsub.f32 %v184, %v100
    %v278 = vsub.f32 %v189, %v100
    %v279 = vsub.f32 %v194, %v100
    %v280 = vsub.f32 %v199, %v100
    %v281 = vsub.f32 %v204, %v100
    %v282 = vsub.f32 %v209, %v100
    %v283 = vsub.f32 %v214, %v100
    %v284 = vsub.f32 %v219, %v100
    %v285 = vsub.f32 %v224, %v100
    %v286 = vsub.f32 %v229, %v100
    %v287 = vsub.f32 %v234, %v100
    %v288 = vsub.f32 %v239, %v100
    %v289 = vsub.f32 %v244, %v100
    %v290 = vsub.f32 %v249, %v100
    %v291 = vsub.f32 %v254, %v100
    %v292 = vsub.f32 %v259, %v100
    %v293 = vmul.f32 %v261, %v261
    %v294 = vmul.f32 %v262, %v262
    %v295 = vmul.f32 %v263, %v263
    %v296 = vmul.f32 %v264, %v264
    %v297 = vmul.f32 %v265, %v265
    %v298 = vmul.f32 %v266, %v266
    %v299 = vmul.f32 %v267, %v267
    %v300 = vmul.f32 %v268, %v268
    %v301 = vmul.f32 %v269, %v269
    %v302 = vmul.f32 %v270, %v270
    %v303 = vmul.f32 %v271, %v271
    %v304 = vmul.f32 %v272, %v272
    %v305 = vmul.f32 %v273, %v273
    %v306 = vmul.f32 %v274, %v274
    %v307 = vmul.f32 %v275, %v275
    %v308 = vmul.f32 %v276, %v276
    %v309 = vmul.f32 %v277, %v277
    %v310 = vmul.f32 %v278, %v278
    %v311 = vmul.f32 %v279, %v279
    %v312 = vmul.f32 %v280, %v280
    %v313 = vmul.f32 %v281, %v281
    %v314 = vmul.f32 %v282, %v282
    %v315 = vmul.f32 %v283, %v283
    %v316 = vmul.f32 %v284, %v284
    %v317 = vmul.f32 %v285, %v285
    %v318 = vmul.f32 %v286, %v286
    %v319 = vmul.f32 %v287, %v287
    %v320 = vmul.f32 %v288, %v288
    %v321 = vmul.f32 %v289, %v289
    %v322 = vmul.f32 %v290, %v290
    %v323 = vmul.f32 %v291, %v291
    %v324 = vmul.f32 %v292, %v292
    %v325 = vmul.f32 %v293, -322.58
    %v326 = vmul.f32 %v294, -322.58
    %v327 = vmul.f32 %v295, -322.58
    %v328 = vmul.f32 %v296, -322.58
    %v329 = vmul.f32 %v297, -322.58
    %v330 = vmul.f32 %v298, -322.58
    %v331 = vmul.f32 %v299, -322.58
    %v332 = vmul.f32 %v300, -322.58
    %v333 = vmul.f32 %v301, -322.58
    %v334 = vmul.f32 %v302, -322.58
    %v335 = vmul.f32 %v303, -322.58
    %v336 = vmul.f32 %v304, -322.58
    %v337 = vmul.f32 %v305, -322.58
    %v338 = vmul.f32 %v306, -322.58
    %v339 = vmul.f32 %v307, -322.58
    %v340 = vmul.f32 %v308, -322.58
    %v341 = vmul.f32 %v309, -322.58
    %v342 = vmul.f32 %v310, -322.58
    %v343 = vmul.f32 %v311, -322.58
    %v344 = vmul.f32 %v312, -322.58
    %v345 = vmul.f32 %v313, -322.58
    %v346 = vmul.f32 %v314, -322.58
    %v347 = vmul.f32 %v315, -322.58
    %v348 = vmul.f32 %v316, -322.58
    %v349 = vmul.f32 %v317, -322.58
    %v350 = vmul.f32 %v318, -322.58
    %v351 = vmul.f32 %v319, -322.58
    %v352 = vmul.f32 %v320, -322.58
    %v353 = vmul.f32 %v321, -322.58
    %v354 = vmul.f32 %v322, -322.58
    %v355 = vmul.f32 %v323, -322.58
    %v356 = vmul.f32 %v324, -322.58
    %v357 = vmul.f32 %v325, 1.442695
    %v358 = vpow.pop %v357
    %v359 = vmul.f32 %v326, 1.442695
    %v360 = vpow.pop %v359
    %v361 = vmul.f32 %v327, 1.442695
    %v362 = vpow.pop %v361
    %v363 = vmul.f32 %v328, 1.442695
    %v364 = vpow.pop %v363
    %v365 = vmul.f32 %v329, 1.442695
    %v366 = vpow.pop %v365
    %v367 = vmul.f32 %v330, 1.442695
    %v368 = vpow.pop %v367
    %v369 = vmul.f32 %v331, 1.442695
    %v370 = vpow.pop %v369
    %v371 = vmul.f32 %v332, 1.442695
    %v372 = vpow.pop %v371
    %v373 = vmul.f32 %v333, 1.442695
    %v374 = vpow.pop %v373
    %v375 = vmul.f32 %v334, 1.442695
    %v376 = vpow.pop %v375
    %v377 = vmul.f32 %v335, 1.442695
    %v378 = vpow.pop %v377
    %v379 = vmul.f32 %v336, 1.442695
    %v380 = vpow.pop %v379
    %v381 = vmul.f32 %v337, 1.442695
    %v382 = vpow.pop %v381
    %v383 = vmul.f32 %v338, 1.442695
    %v384 = vpow.pop %v383
    %v385 = vmul.f32 %v339, 1.442695
    %v386 = vpow.pop %v385
    %v387 = vmul.f32 %v340, 1.442695
    %v388 = vpow.pop %v387
    %v389 = vmul.f32 %v341, 1.442695
    %v390 = vpow.pop %v389
    %v391 = vmul.f32 %v342, 1.442695
    %v392 = vpow.pop %v391
    %v393 = vmul.f32 %v343, 1.442695
    %v394 = vpow.pop %v393
    %v395 = vmul.f32 %v344, 1.442695
    %v396 = vpow.pop %v395
    %v397 = vmul.f32 %v345, 1.442695
    %v398 = vpow.pop %v397
    %v399 = vmul.f32 %v346, 1.442695
    %v400 = vpow.pop %v399
    %v401 = vmul.f32 %v347, 1.442695
    %v402 = vpow.pop %v401
    %v403 = vmul.f32 %v348, 1.442695
    %v404 = vpow.pop %v403
    %v405 = vmul.f32 %v349, 1.442695
    %v406 = vpow.pop %v405
    %v407 = vmul.f32 %v350, 1.442695
    %v408 = vpow.pop %v407
    %v409 = vmul.f32 %v351, 1.442695
    %v410 = vpow.pop %v409
    %v411 = vmul.f32 %v352, 1.442695
    %v412 = vpow.pop %v411
    %v413 = vmul.f32 %v353, 1.442695
    %v414 = vpow.pop %v413
    %v415 = vmul.f32 %v354, 1.442695
    %v416 = vpow.pop %v415
    %v417 = vmul.f32 %v355, 1.442695
    %v418 = vpow.pop %v417
    %v419 = vmul.f32 %v356, 1.442695
    %v420 = vpow.pop %v419
    %421 = vst [vmem:[#allocation5] sm:$0xff] %v358
    %422 = vst [vmem:[#allocation5 + $0x8] sm:$0xff] %v360
    %423 = vst [vmem:[#allocation5 + $0x10] sm:$0xff] %v362
    %424 = vst [vmem:[#allocation5 + $0x18] sm:$0xff] %v364
    %425 = vst [vmem:[#allocation5 + $0x20] sm:$0xff] %v366
    %426 = vst [vmem:[#allocation5 + $0x28] sm:$0xff] %v368
    %427 = vst [vmem:[#allocation5 + $0x30] sm:$0xff] %v370
    %428 = vst [vmem:[#allocation5 + $0x38] sm:$0xff] %v372
    %429 = vst [vmem:[#allocation5 + $0x40] sm:$0xff] %v374
    %430 = vst [vmem:[#allocation5 + $0x48] sm:$0xff] %v376
    %431 = vst [vmem:[#allocation5 + $0x50] sm:$0xff] %v378
    %432 = vst [vmem:[#allocation5 + $0x58] sm:$0xff] %v380
    %433 = vst [vmem:[#allocation5 + $0x60] sm:$0xff] %v382
    %434 = vst [vmem:[#allocation5 + $0x68] sm:$0xff] %v384
    %435 = vst [vmem:[#allocation5 + $0x70] sm:$0xff] %v386
    %436 = vst [vmem:[#allocation5 + $0x78] sm:$0xff] %v388
    %437 = vst [vmem:[#allocation5 + $0x80] sm:$0xff] %v390
    %438 = vst [vmem:[#allocation5 + $0x88] sm:$0xff] %v392
    %439 = vst [vmem:[#allocation5 + $0x90] sm:$0xff] %v394
    %440 = vst [vmem:[#allocation5 + $0x98] sm:$0xff] %v396
    %441 = vst [vmem:[#allocation5 + $0xa0] sm:$0xff] %v398
    %442 = vst [vmem:[#allocation5 + $0xa8] sm:$0xff] %v400
    %443 = vst [vmem:[#allocation5 + $0xb0] sm:$0xff] %v402
    %444 = vst [vmem:[#allocation5 + $0xb8] sm:$0xff] %v404
    %445 = vst [vmem:[#allocation5 + $0xc0] sm:$0xff] %v406
    %446 = vst [vmem:[#allocation5 + $0xc8] sm:$0xff] %v408
    %447 = vst [vmem:[#allocation5 + $0xd0] sm:$0xff] %v410
    %448 = vst [vmem:[#allocation5 + $0xd8] sm:$0xff] %v412
    %449 = vst [vmem:[#allocation5 + $0xe0] sm:$0xff] %v414
    %450 = vst [vmem:[#allocation5 + $0xe8] sm:$0xff] %v416
    %451 = vst [vmem:[#allocation5 + $0xf0] sm:$0xff] %v418
    %452 = vst [vmem:[#allocation5 + $0xf8] sm:$0xff] %v420
    // Predicated region
    $region10: #{tpu_custom_call.1} parent=1 // pred_check
      _
    $region11: #{tpu_custom_call.1} parent=1 // pred_check_branch
      %454 = sbr.rel (0) target = $region13
    $region12: #{tpu_custom_call.1} parent=1 // pred_region
      %s456 = ssub.s32 4096, 4096
      %457 = vsyncadd [#allocation4], %s456
      %s458 = sshll.u32 [#allocation5], 4
      %s459 = int_to_ptr.vmem [resolvable:$true] %s458
      %464 = dma.vmem_to_hbm [thread:$0]  %s459, 4096, %s1, [#allocation4], 128, 128, 8
    $region13: #{tpu_custom_call.1} parent=1 // pred_fallthru
      _
    // Predicated region
    $region14: #{tpu_custom_call.1} parent=1 // pred_check
      _
    $region15: #{tpu_custom_call.1} parent=1 // pred_check_branch
      %466 = sbr.rel (0) target = $region17
    $region16: #{tpu_custom_call.1} parent=1 // pred_region
      %467 = dma.done [#allocation4], 4096
    $region17: #{tpu_custom_call.1} parent=1 // pred_fallthru
      _
    %468 = vsyncpa [#allocation3], 1
    %469 = vsyncpa [#allocation4], 1

// kernel: tpu_custom_call.1
$region0: #{tpu_custom_call.1}
  #allocation0 [shape = 'u32[]', space=smem, size = 0x4, offset = 0x4, fixed_abs, tag = 'smem constant byte address 0x4 - core index']
  #allocation1 [shape = 'u32[144,128]{1,0:T(1,128)}', space=vmem, size = 0x12000, scoped, tag = 'internal scratch']
  %s0 = inlined_call_operand.vmem [shape: f32[300,1], index: 0, kind: input, shape index: {}]
  %s1 = inlined_call_operand.hbm [shape: f32[300,128], index: 1, kind: output, shape index: {}]
  %s2 = sld [smem:[#allocation0]]
  $region14: #{tpu_custom_call.1} parent=0
    _
  %s4 = ssub.s32 1, %s2
  %s5 = scalar_select 0, %s4, %s2
  $region1: #{tpu_custom_call.1} parent=0
    #allocation2 [shape = 'u8[155648]{0}', space=vmem, size = 0x26000, scoped, tag = 'output window, operand 0, single buffered']
    #allocation3 [shape = 's32[1]{0}', space=sflag, size = 0x4, scoped, tag = 'scoped memory for tpu_custom_call.1']
    %6 = vsyncpa [#allocation3], 0
    // Predicated region
    $region2: #{tpu_custom_call.1} parent=1 // pred_check
      _
    $region3: #{tpu_custom_call.1} parent=1 // pred_check_branch
      %8 = sbr.rel (0) target = $region5
    $region4: #{tpu_custom_call.1} parent=1 // pred_region
      _
    $region5: #{tpu_custom_call.1} parent=1 // pred_fallthru
      _
    %v9 = vld [vmem:[%s0] sm:$0xff]
    %v10 = vld [vmem:[%s0 + $0x8] sm:$0xff]
    %v11 = vld [vmem:[%s0 + $0x10] sm:$0xff]
    %v12 = vld [vmem:[%s0 + $0x18] sm:$0xff]
    %v13 = vld [vmem:[%s0 + $0x20] sm:$0xff]
    %v14 = vld [vmem:[%s0 + $0x28] sm:$0xff]
    %v15 = vld [vmem:[%s0 + $0x30] sm:$0xff]
    %v16 = vld [vmem:[%s0 + $0x38] sm:$0xff]
    %v17 = vld [vmem:[%s0 + $0x40] sm:$0xff]
    %v18 = vld [vmem:[%s0 + $0x48] sm:$0xff]
    %v19 = vld [vmem:[%s0 + $0x50] sm:$0xff]
    %v20 = vld [vmem:[%s0 + $0x58] sm:$0xff]
    %v21 = vld [vmem:[%s0 + $0x60] sm:$0xff]
    %v22 = vld [vmem:[%s0 + $0x68] sm:$0xff]
    %v23 = vld [vmem:[%s0 + $0x70] sm:$0xff]
    %v24 = vld [vmem:[%s0 + $0x78] sm:$0xff]
    %v25 = vld [vmem:[%s0 + $0x80] sm:$0xff]
    %v26 = vld [vmem:[%s0 + $0x88] sm:$0xff]
    %v27 = vld [vmem:[%s0 + $0x90] sm:$0xff]
    %v28 = vld [vmem:[%s0 + $0x98] sm:$0xff]
    %v29 = vld [vmem:[%s0 + $0xa0] sm:$0xff]
    %v30 = vld [vmem:[%s0 + $0xa8] sm:$0xff]
    %v31 = vld [vmem:[%s0 + $0xb0] sm:$0xff]
    %v32 = vld [vmem:[%s0 + $0xb8] sm:$0xff]
    %v33 = vld [vmem:[%s0 + $0xc0] sm:$0xff]
    %v34 = vld [vmem:[%s0 + $0xc8] sm:$0xff]
    %v35 = vld [vmem:[%s0 + $0xd0] sm:$0xff]
    %v36 = vld [vmem:[%s0 + $0xd8] sm:$0xff]
    %v37 = vld [vmem:[%s0 + $0xe0] sm:$0xff]
    %v38 = vld [vmem:[%s0 + $0xe8] sm:$0xff]
    %v39 = vld [vmem:[%s0 + $0xf0] sm:$0xff]
    %v40 = vld [vmem:[%s0 + $0xf8] sm:$0xff]
    %v41 = vld [vmem:[%s0 + $0x100] sm:$0xff]
    %v42 = vld [vmem:[%s0 + $0x108] sm:$0xff]
    %v43 = vld [vmem:[%s0 + $0x110] sm:$0xff]
    %v44 = vld [vmem:[%s0 + $0x118] sm:$0xff]
    %v45 = vld [vmem:[%s0 + $0x120] sm:$0xff]
    %v46 = vld [vmem:[%s0 + $0x128] sm:$0xff]
    %v47 = vlaneseq
    %v48 = vand.u32 %v47, 127
    %v49 = vcvt.s32.f32 %v48
    %v50 = vmul.f32 %v49, 0.03937008
    %52 = vset.pattern.permute.xlu0 0
    %53 = vperm.xlu0 %52, %v9
    %v54 = vpop.permute.xlu0 %53
    %57 = vset.pattern.permute.xlu0 0
    %58 = vperm.xlu0 %57, %v10
    %v59 = vpop.permute.xlu0 %58
    %62 = vset.pattern.permute.xlu0 0
    %63 = vperm.xlu0 %62, %v11
    %v64 = vpop.permute.xlu0 %63
    %67 = vset.pattern.permute.xlu0 0
    %68 = vperm.xlu0 %67, %v12
    %v69 = vpop.permute.xlu0 %68
    %72 = vset.pattern.permute.xlu0 0
    %73 = vperm.xlu0 %72, %v13
    %v74 = vpop.permute.xlu0 %73
    %77 = vset.pattern.permute.xlu0 0
    %78 = vperm.xlu0 %77, %v14
    %v79 = vpop.permute.xlu0 %78
    %82 = vset.pattern.permute.xlu0 0
    %83 = vperm.xlu0 %82, %v15
    %v84 = vpop.permute.xlu0 %83
    %87 = vset.pattern.permute.xlu0 0
    %88 = vperm.xlu0 %87, %v16
    %v89 = vpop.permute.xlu0 %88
    %92 = vset.pattern.permute.xlu0 0
    %93 = vperm.xlu0 %92, %v17
    %v94 = vpop.permute.xlu0 %93
    %97 = vset.pattern.permute.xlu0 0
    %98 = vperm.xlu0 %97, %v18
    %v99 = vpop.permute.xlu0 %98
    %102 = vset.pattern.permute.xlu0 0
    %103 = vperm.xlu0 %102, %v19
    %v104 = vpop.permute.xlu0 %103
    %107 = vset.pattern.permute.xlu0 0
    %108 = vperm.xlu0 %107, %v20
    %v109 = vpop.permute.xlu0 %108
    %112 = vset.pattern.permute.xlu0 0
    %113 = vperm.xlu0 %112, %v21
    %v114 = vpop.permute.xlu0 %113
    %117 = vset.pattern.permute.xlu0 0
    %118 = vperm.xlu0 %117, %v22
    %v119 = vpop.permute.xlu0 %118
    %122 = vset.pattern.permute.xlu0 0
    %123 = vperm.xlu0 %122, %v23
    %v124 = vpop.permute.xlu0 %123
    %127 = vset.pattern.permute.xlu0 0
    %128 = vperm.xlu0 %127, %v24
    %v129 = vpop.permute.xlu0 %128
    %132 = vset.pattern.permute.xlu0 0
    %133 = vperm.xlu0 %132, %v25
    %v134 = vpop.permute.xlu0 %133
    %137 = vset.pattern.permute.xlu0 0
    %138 = vperm.xlu0 %137, %v26
    %v139 = vpop.permute.xlu0 %138
    %142 = vset.pattern.permute.xlu0 0
    %143 = vperm.xlu0 %142, %v27
    %v144 = vpop.permute.xlu0 %143
    %147 = vset.pattern.permute.xlu0 0
    %148 = vperm.xlu0 %147, %v28
    %v149 = vpop.permute.xlu0 %148
    %152 = vset.pattern.permute.xlu0 0
    %153 = vperm.xlu0 %152, %v29
    %v154 = vpop.permute.xlu0 %153
    %157 = vset.pattern.permute.xlu0 0
    %158 = vperm.xlu0 %157, %v30
    %v159 = vpop.permute.xlu0 %158
    %162 = vset.pattern.permute.xlu0 0
    %163 = vperm.xlu0 %162, %v31
    %v164 = vpop.permute.xlu0 %163
    %167 = vset.pattern.permute.xlu0 0
    %168 = vperm.xlu0 %167, %v32
    %v169 = vpop.permute.xlu0 %168
    %172 = vset.pattern.permute.xlu0 0
    %173 = vperm.xlu0 %172, %v33
    %v174 = vpop.permute.xlu0 %173
    %177 = vset.pattern.permute.xlu0 0
    %178 = vperm.xlu0 %177, %v34
    %v179 = vpop.permute.xlu0 %178
    %182 = vset.pattern.permute.xlu0 0
    %183 = vperm.xlu0 %182, %v35
    %v184 = vpop.permute.xlu0 %183
    %187 = vset.pattern.permute.xlu0 0
    %188 = vperm.xlu0 %187, %v36
    %v189 = vpop.permute.xlu0 %188
    %192 = vset.pattern.permute.xlu0 0
    %193 = vperm.xlu0 %192, %v37
    %v194 = vpop.permute.xlu0 %193
    %197 = vset.pattern.permute.xlu0 0
    %198 = vperm.xlu0 %197, %v38
    %v199 = vpop.permute.xlu0 %198
    %202 = vset.pattern.permute.xlu0 0
    %203 = vperm.xlu0 %202, %v39
    %v204 = vpop.permute.xlu0 %203
    %207 = vset.pattern.permute.xlu0 0
    %208 = vperm.xlu0 %207, %v40
    %v209 = vpop.permute.xlu0 %208
    %212 = vset.pattern.permute.xlu0 0
    %213 = vperm.xlu0 %212, %v41
    %v214 = vpop.permute.xlu0 %213
    %217 = vset.pattern.permute.xlu0 0
    %218 = vperm.xlu0 %217, %v42
    %v219 = vpop.permute.xlu0 %218
    %222 = vset.pattern.permute.xlu0 0
    %223 = vperm.xlu0 %222, %v43
    %v224 = vpop.permute.xlu0 %223
    %227 = vset.pattern.permute.xlu0 0
    %228 = vperm.xlu0 %227, %v44
    %v229 = vpop.permute.xlu0 %228
    %232 = vset.pattern.permute.xlu0 0
    %233 = vperm.xlu0 %232, %v45
    %v234 = vpop.permute.xlu0 %233
    %237 = vset.pattern.permute.xlu0 0
    %238 = vperm.xlu0 %237, %v46
    %v239 = vpop.permute.xlu0 %238
    %v241 = vsub.f32 %v54, %v50
    %v242 = vsub.f32 %v59, %v50
    %v243 = vsub.f32 %v64, %v50
    %v244 = vsub.f32 %v69, %v50
    %v245 = vsub.f32 %v74, %v50
    %v246 = vsub.f32 %v79, %v50
    %v247 = vsub.f32 %v84, %v50
    %v248 = vsub.f32 %v89, %v50
    %v249 = vsub.f32 %v94, %v50
    %v250 = vsub.f32 %v99, %v50
    %v251 = vsub.f32 %v104, %v50
    %v252 = vsub.f32 %v109, %v50
    %v253 = vsub.f32 %v114, %v50
    %v254 = vsub.f32 %v119, %v50
    %v255 = vsub.f32 %v124, %v50
    %v256 = vsub.f32 %v129, %v50
    %v257 = vsub.f32 %v134, %v50
    %v258 = vsub.f32 %v139, %v50
    %v259 = vsub.f32 %v144, %v50
    %v260 = vsub.f32 %v149, %v50
    %v261 = vsub.f32 %v154, %v50
    %v262 = vsub.f32 %v159, %v50
    %v263 = vsub.f32 %v164, %v50
    %v264 = vsub.f32 %v169, %v50
    %v265 = vsub.f32 %v174, %v50
    %v266 = vsub.f32 %v179, %v50
    %v267 = vsub.f32 %v184, %v50
    %v268 = vsub.f32 %v189, %v50
    %v269 = vsub.f32 %v194, %v50
    %v270 = vsub.f32 %v199, %v50
    %v271 = vsub.f32 %v204, %v50
    %v272 = vsub.f32 %v209, %v50
    %v273 = vsub.f32 %v214, %v50
    %v274 = vsub.f32 %v219, %v50
    %v275 = vsub.f32 %v224, %v50
    %v276 = vsub.f32 %v229, %v50
    %v277 = vsub.f32 %v234, %v50
    %v278 = vsub.f32 %v239, %v50
    %v279 = vmul.f32 %v241, %v241
    %v280 = vmul.f32 %v242, %v242
    %v281 = vmul.f32 %v243, %v243
    %v282 = vmul.f32 %v244, %v244
    %v283 = vmul.f32 %v245, %v245
    %v284 = vmul.f32 %v246, %v246
    %v285 = vmul.f32 %v247, %v247
    %v286 = vmul.f32 %v248, %v248
    %v287 = vmul.f32 %v249, %v249
    %v288 = vmul.f32 %v250, %v250
    %v289 = vmul.f32 %v251, %v251
    %v290 = vmul.f32 %v252, %v252
    %v291 = vmul.f32 %v253, %v253
    %v292 = vmul.f32 %v254, %v254
    %v293 = vmul.f32 %v255, %v255
    %v294 = vmul.f32 %v256, %v256
    %v295 = vmul.f32 %v257, %v257
    %v296 = vmul.f32 %v258, %v258
    %v297 = vmul.f32 %v259, %v259
    %v298 = vmul.f32 %v260, %v260
    %v299 = vmul.f32 %v261, %v261
    %v300 = vmul.f32 %v262, %v262
    %v301 = vmul.f32 %v263, %v263
    %v302 = vmul.f32 %v264, %v264
    %v303 = vmul.f32 %v265, %v265
    %v304 = vmul.f32 %v266, %v266
    %v305 = vmul.f32 %v267, %v267
    %v306 = vmul.f32 %v268, %v268
    %v307 = vmul.f32 %v269, %v269
    %v308 = vmul.f32 %v270, %v270
    %v309 = vmul.f32 %v271, %v271
    %v310 = vmul.f32 %v272, %v272
    %v311 = vmul.f32 %v273, %v273
    %v312 = vmul.f32 %v274, %v274
    %v313 = vmul.f32 %v275, %v275
    %v314 = vmul.f32 %v276, %v276
    %v315 = vmul.f32 %v277, %v277
    %v316 = vmul.f32 %v278, %v278
    %v317 = vmul.f32 %v279, -322.58
    %v318 = vmul.f32 %v280, -322.58
    %v319 = vmul.f32 %v281, -322.58
    %v320 = vmul.f32 %v282, -322.58
    %v321 = vmul.f32 %v283, -322.58
    %v322 = vmul.f32 %v284, -322.58
    %v323 = vmul.f32 %v285, -322.58
    %v324 = vmul.f32 %v286, -322.58
    %v325 = vmul.f32 %v287, -322.58
    %v326 = vmul.f32 %v288, -322.58
    %v327 = vmul.f32 %v289, -322.58
    %v328 = vmul.f32 %v290, -322.58
    %v329 = vmul.f32 %v291, -322.58
    %v330 = vmul.f32 %v292, -322.58
    %v331 = vmul.f32 %v293, -322.58
    %v332 = vmul.f32 %v294, -322.58
    %v333 = vmul.f32 %v295, -322.58
    %v334 = vmul.f32 %v296, -322.58
    %v335 = vmul.f32 %v297, -322.58
    %v336 = vmul.f32 %v298, -322.58
    %v337 = vmul.f32 %v299, -322.58
    %v338 = vmul.f32 %v300, -322.58
    %v339 = vmul.f32 %v301, -322.58
    %v340 = vmul.f32 %v302, -322.58
    %v341 = vmul.f32 %v303, -322.58
    %v342 = vmul.f32 %v304, -322.58
    %v343 = vmul.f32 %v305, -322.58
    %v344 = vmul.f32 %v306, -322.58
    %v345 = vmul.f32 %v307, -322.58
    %v346 = vmul.f32 %v308, -322.58
    %v347 = vmul.f32 %v309, -322.58
    %v348 = vmul.f32 %v310, -322.58
    %v349 = vmul.f32 %v311, -322.58
    %v350 = vmul.f32 %v312, -322.58
    %v351 = vmul.f32 %v313, -322.58
    %v352 = vmul.f32 %v314, -322.58
    %v353 = vmul.f32 %v315, -322.58
    %v354 = vmul.f32 %v316, -322.58
    %v355 = vmul.f32 %v317, 1.442695
    %v356 = vpow.pop %v355
    %v357 = vmul.f32 %v318, 1.442695
    %v358 = vpow.pop %v357
    %v359 = vmul.f32 %v319, 1.442695
    %v360 = vpow.pop %v359
    %v361 = vmul.f32 %v320, 1.442695
    %v362 = vpow.pop %v361
    %v363 = vmul.f32 %v321, 1.442695
    %v364 = vpow.pop %v363
    %v365 = vmul.f32 %v322, 1.442695
    %v366 = vpow.pop %v365
    %v367 = vmul.f32 %v323, 1.442695
    %v368 = vpow.pop %v367
    %v369 = vmul.f32 %v324, 1.442695
    %v370 = vpow.pop %v369
    %v371 = vmul.f32 %v325, 1.442695
    %v372 = vpow.pop %v371
    %v373 = vmul.f32 %v326, 1.442695
    %v374 = vpow.pop %v373
    %v375 = vmul.f32 %v327, 1.442695
    %v376 = vpow.pop %v375
    %v377 = vmul.f32 %v328, 1.442695
    %v378 = vpow.pop %v377
    %v379 = vmul.f32 %v329, 1.442695
    %v380 = vpow.pop %v379
    %v381 = vmul.f32 %v330, 1.442695
    %v382 = vpow.pop %v381
    %v383 = vmul.f32 %v331, 1.442695
    %v384 = vpow.pop %v383
    %v385 = vmul.f32 %v332, 1.442695
    %v386 = vpow.pop %v385
    %v387 = vmul.f32 %v333, 1.442695
    %v388 = vpow.pop %v387
    %v389 = vmul.f32 %v334, 1.442695
    %v390 = vpow.pop %v389
    %v391 = vmul.f32 %v335, 1.442695
    %v392 = vpow.pop %v391
    %v393 = vmul.f32 %v336, 1.442695
    %v394 = vpow.pop %v393
    %v395 = vmul.f32 %v337, 1.442695
    %v396 = vpow.pop %v395
    %v397 = vmul.f32 %v338, 1.442695
    %v398 = vpow.pop %v397
    %v399 = vmul.f32 %v339, 1.442695
    %v400 = vpow.pop %v399
    %v401 = vmul.f32 %v340, 1.442695
    %v402 = vpow.pop %v401
    %v403 = vmul.f32 %v341, 1.442695
    %v404 = vpow.pop %v403
    %v405 = vmul.f32 %v342, 1.442695
    %v406 = vpow.pop %v405
    %v407 = vmul.f32 %v343, 1.442695
    %v408 = vpow.pop %v407
    %v409 = vmul.f32 %v344, 1.442695
    %v410 = vpow.pop %v409
    %v411 = vmul.f32 %v345, 1.442695
    %v412 = vpow.pop %v411
    %v413 = vmul.f32 %v346, 1.442695
    %v414 = vpow.pop %v413
    %v415 = vmul.f32 %v347, 1.442695
    %v416 = vpow.pop %v415
    %v417 = vmul.f32 %v348, 1.442695
    %v418 = vpow.pop %v417
    %v419 = vmul.f32 %v349, 1.442695
    %v420 = vpow.pop %v419
    %v421 = vmul.f32 %v350, 1.442695
    %v422 = vpow.pop %v421
    %v423 = vmul.f32 %v351, 1.442695
    %v424 = vpow.pop %v423
    %v425 = vmul.f32 %v352, 1.442695
    %v426 = vpow.pop %v425
    %v427 = vmul.f32 %v353, 1.442695
    %v428 = vpow.pop %v427
    %v429 = vmul.f32 %v354, 1.442695
    %v430 = vpow.pop %v429
    %431 = vst [vmem:[#allocation2] sm:$0xff] %v356
    %432 = vst [vmem:[#allocation2 + $0x8] sm:$0xff] %v358
    %433 = vst [vmem:[#allocation2 + $0x10] sm:$0xff] %v360
    %434 = vst [vmem:[#allocation2 + $0x18] sm:$0xff] %v362
    %435 = vst [vmem:[#allocation2 + $0x20] sm:$0xff] %v364
    %436 = vst [vmem:[#allocation2 + $0x28] sm:$0xff] %v366
    %437 = vst [vmem:[#allocation2 + $0x30] sm:$0xff] %v368
    %438 = vst [vmem:[#allocation2 + $0x38] sm:$0xff] %v370
    %439 = vst [vmem:[#allocation2 + $0x40] sm:$0xff] %v372
    %440 = vst [vmem:[#allocation2 + $0x48] sm:$0xff] %v374
    %441 = vst [vmem:[#allocation2 + $0x50] sm:$0xff] %v376
    %442 = vst [vmem:[#allocation2 + $0x58] sm:$0xff] %v378
    %443 = vst [vmem:[#allocation2 + $0x60] sm:$0xff] %v380
    %444 = vst [vmem:[#allocation2 + $0x68] sm:$0xff] %v382
    %445 = vst [vmem:[#allocation2 + $0x70] sm:$0xff] %v384
    %446 = vst [vmem:[#allocation2 + $0x78] sm:$0xff] %v386
    %447 = vst [vmem:[#allocation2 + $0x80] sm:$0xff] %v388
    %448 = vst [vmem:[#allocation2 + $0x88] sm:$0xff] %v390
    %449 = vst [vmem:[#allocation2 + $0x90] sm:$0xff] %v392
    %450 = vst [vmem:[#allocation2 + $0x98] sm:$0xff] %v394
    %451 = vst [vmem:[#allocation2 + $0xa0] sm:$0xff] %v396
    %452 = vst [vmem:[#allocation2 + $0xa8] sm:$0xff] %v398
    %453 = vst [vmem:[#allocation2 + $0xb0] sm:$0xff] %v400
    %454 = vst [vmem:[#allocation2 + $0xb8] sm:$0xff] %v402
    %455 = vst [vmem:[#allocation2 + $0xc0] sm:$0xff] %v404
    %456 = vst [vmem:[#allocation2 + $0xc8] sm:$0xff] %v406
    %457 = vst [vmem:[#allocation2 + $0xd0] sm:$0xff] %v408
    %458 = vst [vmem:[#allocation2 + $0xd8] sm:$0xff] %v410
    %459 = vst [vmem:[#allocation2 + $0xe0] sm:$0xff] %v412
    %460 = vst [vmem:[#allocation2 + $0xe8] sm:$0xff] %v414
    %461 = vst [vmem:[#allocation2 + $0xf0] sm:$0xff] %v416
    %462 = vst [vmem:[#allocation2 + $0xf8] sm:$0xff] %v418
    %463 = vst [vmem:[#allocation2 + $0x100] sm:$0xff] %v420
    %464 = vst [vmem:[#allocation2 + $0x108] sm:$0xff] %v422
    %465 = vst [vmem:[#allocation2 + $0x110] sm:$0xff] %v424
    %466 = vst [vmem:[#allocation2 + $0x118] sm:$0xff] %v426
    %467 = vst [vmem:[#allocation2 + $0x120] sm:$0xff] %v428
    %468 = vst [vmem:[#allocation2 + $0x128] sm:$0xff] %v430
    // Predicated region
    $region6: #{tpu_custom_call.1} parent=1 // pred_check
      _
    $region7: #{tpu_custom_call.1} parent=1 // pred_check_branch
      %470 = sbr.rel (0) target = $region9
    $region8: #{tpu_custom_call.1} parent=1 // pred_region
      %s472 = ssub.s32 4864, 4864
      %473 = vsyncadd [#allocation3], %s472
      %s474 = sshll.u32 [#allocation2], 4
      %s475 = int_to_ptr.vmem [resolvable:$true] %s474
      %480 = dma.vmem_to_hbm [thread:$0]  %s475, 4864, %s1, [#allocation3], 128, 128, 8
    $region9: #{tpu_custom_call.1} parent=1 // pred_fallthru
      _
    // Predicated region
    $region10: #{tpu_custom_call.1} parent=1 // pred_check
      _
    $region11: #{tpu_custom_call.1} parent=1 // pred_check_branch
      %482 = sbr.rel (0) target = $region13
    $region12: #{tpu_custom_call.1} parent=1 // pred_region
      %483 = dma.done [#allocation3], 4864
    $region13: #{tpu_custom_call.1} parent=1 // pred_fallthru
      _
    %484 = vsyncpa [#allocation3], 1

</llo_original>
